<compile_context>
chip_gen: v5e
topology: v5e:2x2
jax: 0.10.0
libtpu: 0.0.40
codegen_flags: <defaults>
</compile_context>

<pallas_src>
import math
import functools

import jax
import jax.numpy as jnp
from jax.experimental import pallas as pl
from jax.experimental.pallas import tpu as pltpu


def _const_spec(block_shape, index_map):
    """BlockSpec for inputs whose block index never changes: single buffer."""
    if hasattr(pl, "Buffered"):
        try:
            return pl.BlockSpec(block_shape, index_map,
                                pipeline_mode=pl.Buffered(1))
        except TypeError:  # older jax without the pipeline_mode kwarg
            pass
    return pl.BlockSpec(block_shape, index_map)


def _vmem_limit(estimate_bytes):
    # Give the estimate 2x headroom, never below the 32 MiB scoped default and
    # never above v7x's 64 MiB physical per-TensorCore budget.
    return int(min(max(32 * 1024 * 1024, 2 * estimate_bytes), 64 * 1024 * 1024))


# ----------------------------------------------------------------------------
# Kernel 1: fused QKV projection   qkv[b, m, :] = x[b, m, :] @ Wqkv + bqkv
# (1/sqrt(head_dim) is pre-folded into the Q columns of Wqkv / bqkv.)
# ----------------------------------------------------------------------------
def _qkv_proj_kernel(x_ref, w_ref, b_ref, out_ref):
    x = x_ref[0]                                                    # (TM, H)
    acc = jnp.dot(x, w_ref[...], preferred_element_type=jnp.float32)
    acc = acc + b_ref[...].astype(jnp.float32)                      # (TM, 3H)
    out_ref[0] = acc.astype(out_ref.dtype)


# ----------------------------------------------------------------------------
# Kernel 2: attention + output dense + residual + LayerNorm, one (b, q-tile)
# per grid step.  Per head only a (TQ, S) score tile is ever materialized.
# ----------------------------------------------------------------------------
def _attention_kernel(q_ref, k_ref, v_ref, x_ref, mask_ref,
                      wo_ref, bo_ref, gamma_ref, beta_ref, out_ref,
                      *, num_heads, head_dim, ln_eps):
    q = q_ref[0]                                   # (TQ, H) compute dtype (pre-scaled Q)
    k = k_ref[0]                                   # (S,  H)
    v = v_ref[0]                                   # (S,  H)
    x = x_ref[0].astype(jnp.float32)               # (TQ, H) residual input

    tq = q.shape[0]
    s_len = k.shape[0]
    hidden = q.shape[1]

    # Hoisted mask broadcast: one (1,S)->(TQ,S) broadcast per grid step instead
    # of one per unrolled head iteration.
    mask = jnp.broadcast_to(mask_ref[0].astype(jnp.float32), (tq, s_len))

    # fp32 accumulator for (ctx @ Wo); built per head -> no lane concat needed.
    proj = jnp.zeros((tq, hidden), jnp.float32)

    for h in range(num_heads):                     # static (unrolled) head loop
        sl = slice(h * head_dim, (h + 1) * head_dim)
        qh, kh, vh = q[:, sl], k[:, sl], v[:, sl]

        # (TQ, S) scores; contract over head_dim (scale already baked into Q).
        scores = jax.lax.dot_general(qh, kh, (((1,), (1,)), ((), ())),
                                     preferred_element_type=jnp.float32)
        scores = scores + mask

        # softmax over keys (fp32 statistics)
        m = jnp.max(scores, axis=-1, keepdims=True)
        e = jnp.exp(scores - m)
        l = jnp.sum(e, axis=-1, keepdims=True)
        p = e * pl.reciprocal(l, approx=True)       # EUP reciprocal, VPU-free

        ctx_h = jnp.dot(p.astype(vh.dtype), vh,
                        preferred_element_type=jnp.float32)           # (TQ, dh)
        # Output projection folded into the head loop (lane-dense N = H push).
        proj = proj + jnp.dot(ctx_h.astype(wo_ref.dtype), wo_ref[sl, :],
                              preferred_element_type=jnp.float32)     # (TQ, H)

    # --- BertSelfOutput: bias + residual + LayerNorm (fused epilogue, fp32) ---
    y = proj + bo_ref[...].astype(jnp.float32) + x
    mu = jnp.mean(y, axis=-1, keepdims=True)
    var = jnp.mean((y - mu) * (y - mu), axis=-1, keepdims=True)       # biased, like torch
    y = (y - mu) * jax.lax.rsqrt(var + ln_eps)
    y = y * gamma_ref[...].astype(jnp.float32) + beta_ref[...].astype(jnp.float32)

    out_ref[0] = y.astype(out_ref.dtype)            # lane-dense (TQ, H) store


def bert_attention(x, attention_mask, params, *, num_heads, ln_eps=1e-12,
                   compute_dtype=jnp.bfloat16, q_block=256, proj_block=256):
    """x: (B, S, H); attention_mask: (B, S) additive mask (0 or -1e4)."""
    B, S, H = x.shape
    head_dim = H // num_heads
    cd = compute_dtype
    cd_bytes = jnp.dtype(cd).itemsize
    out_bytes = jnp.dtype(x.dtype).itemsize

    TQ = min(q_block, S)
    # v7x shards the parallel grid across 2 TensorCores: keep B*(S/TQ) >= 2.
    if B == 1 and TQ == S and S % 2 == 0 and (S // 2) % 8 == 0:
        TQ = S // 2
    TM = min(proj_block, S)
    assert S % TQ == 0 and S % TM == 0, "seq length must divide the tile sizes"

    xc = x.astype(cd)

    # Fused QKV weight (H, 3H); 1/sqrt(head_dim) baked into the Q columns so the
    # attention kernel never multiplies scores by `scale`.
    scale = 1.0 / math.sqrt(head_dim)
    wqkv = jnp.concatenate(
        [params["wq"] * scale, params["wk"], params["wv"]], axis=1).astype(cd)
    bqkv = jnp.concatenate(
        [params["bq"] * scale, params["bk"], params["bv"]], axis=1).astype(jnp.float32)

    # ---------------- fused QKV projection ----------------
    qkv_vmem = (2 * TM * H * cd_bytes                    # x tile (double-buffered)
                + H * 3 * H * cd_bytes + 3 * H * 4       # Wqkv + bqkv (single)
                + 2 * TM * 3 * H * cd_bytes              # out tile (double-buffered)
                + TM * 3 * H * 4)                        # fp32 accumulate temp
    qkv = pl.pallas_call(
        _qkv_proj_kernel,
        out_shape=jax.ShapeDtypeStruct((B, S, 3 * H), cd),
        grid_spec=pltpu.PrefetchScalarGridSpec(
            num_scalar_prefetch=0,
            grid=(B, S // TM),
            in_specs=[
                pl.BlockSpec((1, TM, H), lambda b, m: (b, m, 0)),     # x tile
                _const_spec((H, 3 * H), lambda b, m: (0, 0)),         # Wqkv
                _const_spec((1, 3 * H), lambda b, m: (0, 0)),         # bqkv
            ],
            out_specs=pl.BlockSpec((1, TM, 3 * H), lambda b, m: (b, m, 0)),
        ),
        compiler_params=pltpu.CompilerParams(
            dimension_semantics=("parallel", "parallel"),
            vmem_limit_bytes=_vmem_limit(qkv_vmem)),
    )(xc, wqkv, bqkv)

    # ---------------- attention + output dense + residual + LayerNorm ----------------
    kernel = functools.partial(_attention_kernel, num_heads=num_heads,
                               head_dim=head_dim, ln_eps=ln_eps)

    # (B, S) -> (B, 1, S) so the mask BlockSpec's trailing dims equal full dims.
    mask3 = attention_mask.astype(jnp.float32).reshape(B, 1, S)

    attn_vmem = (2 * 2 * S * H * cd_bytes                # K, V slabs (double-buffered)
                 + 2 * 2 * TQ * H * cd_bytes             # Q tile + residual tile
                 + H * H * cd_bytes + 3 * H * 4          # Wo + bo/gamma/beta (single)
                 + 2 * S * 4                             # mask
                 + 2 * TQ * H * out_bytes                # out tile
                 + 3 * TQ * S * 4 + 2 * TQ * H * 4)      # softmax + fp32 temps

    out = pl.pallas_call(
        kernel,
        out_shape=jax.ShapeDtypeStruct((B, S, H), x.dtype),
        grid_spec=pltpu.PrefetchScalarGridSpec(
            num_scalar_prefetch=0,
            grid=(B, S // TQ),
            in_specs=[
                pl.BlockSpec((1, TQ, H), lambda b, qi: (b, qi, 0)),   # Q tile  (cols [0,H))
                pl.BlockSpec((1, S, H), lambda b, qi: (b, 0, 1)),     # K slab  (cols [H,2H))
                pl.BlockSpec((1, S, H), lambda b, qi: (b, 0, 2)),     # V slab  (cols [2H,3H))
                pl.BlockSpec((1, TQ, H), lambda b, qi: (b, qi, 0)),   # residual x tile
                pl.BlockSpec((1, 1, S), lambda b, qi: (b, 0, 0)),     # additive mask
                _const_spec((H, H), lambda b, qi: (0, 0)),            # Wo
                _const_spec((1, H), lambda b, qi: (0, 0)),            # bo
                _const_spec((1, H), lambda b, qi: (0, 0)),            # gamma
                _const_spec((1, H), lambda b, qi: (0, 0)),            # beta
            ],
            out_specs=pl.BlockSpec((1, TQ, H), lambda b, qi: (b, qi, 0)),
        ),
        compiler_params=pltpu.CompilerParams(
            dimension_semantics=("parallel", "parallel"),
            vmem_limit_bytes=_vmem_limit(attn_vmem)),
    )(qkv, qkv, qkv, xc, mask3,
      params["wo"].astype(cd), params["bo"].astype(jnp.float32),
      params["gamma"].astype(jnp.float32), params["beta"].astype(jnp.float32))

    return out


def reference_bert_attention(x, attention_mask, params, *, num_heads, ln_eps=1e-12):
    """Pure-JAX fp32 reference mirroring the PyTorch forward (eval mode)."""
    B, S, H = x.shape
    dh = H // num_heads
    q = x @ params["wq"] + params["bq"]
    k = x @ params["wk"] + params["bk"]
    v = x @ params["wv"] + params["bv"]

    def split(t):  # (B,S,H) -> (B,nh,S,dh)
        return t.reshape(B, S, num_heads, dh).transpose(0, 2, 1, 3)

    qh, kh, vh = split(q), split(k), split(v)
    scores = jnp.einsum('bhqd,bhkd->bhqk', qh, kh) / math.sqrt(dh)
    scores = scores + attention_mask[:, None, None, :]
    probs = jax.nn.softmax(scores, axis=-1)
    ctx = jnp.einsum('bhqk,bhkd->bhqd', probs, vh)
    ctx = ctx.transpose(0, 2, 1, 3).reshape(B, S, H)
    proj = ctx @ params["wo"] + params["bo"] + x
    mu = jnp.mean(proj, axis=-1, keepdims=True)
    var = jnp.mean((proj - mu) ** 2, axis=-1, keepdims=True)
    y = (proj - mu) / jnp.sqrt(var + ln_eps)
    return y * params["gamma"] + params["beta"]


if __name__ == "__main__":
    # Lane-aligned small shapes (S, H multiples of 128) so the kernel exercises
    # the same codegen as production BERT shapes.
    B, S, H = 2, 128, 128
    num_heads = 4

    key = jax.random.PRNGKey(0)
    ks = jax.random.split(key, 10)

    def lin_w(k):  # pre-transposed: [in, out]
        return jax.random.normal(k, (H, H), jnp.float32) * 0.05

    params = {
        "wq": lin_w(ks[0]), "bq": jax.random.normal(ks[1], (1, H), jnp.float32) * 0.02,
        "wk": lin_w(ks[2]), "bk": jax.random.normal(ks[3], (1, H), jnp.float32) * 0.02,
        "wv": lin_w(ks[4]), "bv": jax.random.normal(ks[5], (1, H), jnp.float32) * 0.02,
        "wo": lin_w(ks[6]), "bo": jax.random.normal(ks[7], (1, H), jnp.float32) * 0.02,
        "gamma": jnp.ones((1, H), jnp.float32),
        "beta": jnp.zeros((1, H), jnp.float32),
    }

    x = jax.random.normal(ks[8], (B, S, H), jnp.float32)
    # additive attention mask: 0 for attended positions, -10000 for masked ones
    mask_bits = (jax.random.uniform(ks[9], (B, S)) > 0.2).astype(jnp.float32)
    attention_mask = (1.0 - mask_bits) * -10000.0

    ref = reference_bert_attention(x, attention_mask, params, num_heads=num_heads)

    # fp32 compute path: tight numerical check of the kernel structure.
    out_f32 = bert_attention(x, attention_mask, params, num_heads=num_heads,
                             compute_dtype=jnp.float32, q_block=64, proj_block=64)
    out_f32 = jax.block_until_ready(out_f32)
    assert out_f32.shape == (B, S, H)
    assert jnp.allclose(out_f32, ref, atol=5e-3, rtol=5e-3), "fp32 mismatch vs reference"

    # bf16 compute path with default (raised) tile sizes: loose check.
    out_bf16 = bert_attention(x, attention_mask, params, num_heads=num_heads,
                              compute_dtype=jnp.bfloat16)
    out_bf16 = jax.block_until_ready(out_bf16)
    assert out_bf16.shape == (B, S, H)
    assert jnp.allclose(out_bf16.astype(jnp.float32), ref, atol=1e-1, rtol=1e-1), \
        "bf16 mismatch vs reference"

    print("KERNEL_OK")
</pallas_src>

<mosaic_0001>
module attributes {stable_mosaic.version = 11 : i64} {
  func.func @_qkv_proj_kernel(%arg0: i32, %arg1: i32, %arg2: memref<1x64x128xf32, #tpu.memory_space<vmem>>, %arg3: memref<128x384xf32, #tpu.memory_space<vmem>>, %arg4: memref<1x384xf32, #tpu.memory_space<vmem>>, %arg5: memref<1x64x384xf32, #tpu.memory_space<vmem>>) attributes {dimension_semantics = [#tpu.dimension_semantics<parallel>, #tpu.dimension_semantics<parallel>], iteration_bounds = array<i64: 2, 2>, scalar_prefetch = 0 : i64, scratch_operands = 0 : i64, tpu.core_type = #tpu.core_type<tc>, window_params = [{transform_indices = @transform_0, window_bounds = array<i64: 1, 64, 128>}, {pipeline_mode = #tpu.pipeline_mode<synchronous>, transform_indices = @transform_1, window_bounds = array<i64: 128, 384>}, {pipeline_mode = #tpu.pipeline_mode<synchronous>, transform_indices = @transform_2, window_bounds = array<i64: 1, 384>}, {transform_indices = @transform_3, window_bounds = array<i64: 1, 64, 384>}]} {
    %c0 = arith.constant 0 : index
    %c0_0 = arith.constant 0 : index
    %c0_1 = arith.constant 0 : index
    %0 = vector.load %arg2[%c0, %c0_0, %c0_1] : memref<1x64x128xf32, #tpu.memory_space<vmem>>, vector<1x64x128xf32>
    %1 = vector.shape_cast %0 : vector<1x64x128xf32> to vector<64x128xf32>
    %c0_2 = arith.constant 0 : index
    %c0_3 = arith.constant 0 : index
    %2 = vector.load %arg3[%c0_2, %c0_3] : memref<128x384xf32, #tpu.memory_space<vmem>>, vector<128x384xf32>
    %cst = arith.constant dense<0.000000e+00> : vector<64x384xf32>
    %3 = tpu.matmul %1, %2, %cst {dimension_numbers = #tpu.dot_dimension_numbers<[1], [0], [0], [1], [0, 0, 1, 1], [], []>} : vector<64x128xf32>, vector<128x384xf32>, vector<64x384xf32> -> vector<64x384xf32>
    %c0_4 = arith.constant 0 : index
    %c0_5 = arith.constant 0 : index
    %4 = vector.load %arg4[%c0_4, %c0_5] : memref<1x384xf32, #tpu.memory_space<vmem>>, vector<1x384xf32>
    %5 = vector.broadcast %4 : vector<1x384xf32> to vector<64x384xf32>
    %6 = arith.addf %3, %5 : vector<64x384xf32>
    %c0_6 = arith.constant 0 : index
    %c0_7 = arith.constant 0 : index
    %c0_8 = arith.constant 0 : index
    %7 = vector.load %arg5[%c0_6, %c0_7, %c0_8] : memref<1x64x384xf32, #tpu.memory_space<vmem>>, vector<1x64x384xf32>
    %8 = vector.shape_cast %7 : vector<1x64x384xf32> to vector<64x384xf32>
    %9 = vector.shape_cast %6 : vector<64x384xf32> to vector<1x64x384xf32>
    tpu.vector_store %arg5[%c0_6, %c0_7, %c0_8], %9 {strides = array<i32>} : memref<1x64x384xf32, #tpu.memory_space<vmem>>, vector<1x64x384xf32>,
    return
  }
  func.func @transform_0(%arg0: i32, %arg1: i32) -> (i32, i32, i32) {
    %c0_i32 = arith.constant 0 : i32
    %c0_i32_0 = arith.constant 0 : i32
    return %arg0, %arg1, %c0_i32 : i32, i32, i32
  }
  func.func @transform_1(%arg0: i32, %arg1: i32) -> (i32, i32) {
    %c0_i32 = arith.constant 0 : i32
    %c0_i32_0 = arith.constant 0 : i32
    %c0_i32_1 = arith.constant 0 : i32
    return %c0_i32, %c0_i32_0 : i32, i32
  }
  func.func @transform_2(%arg0: i32, %arg1: i32) -> (i32, i32) {
    %c0_i32 = arith.constant 0 : i32
    %c0_i32_0 = arith.constant 0 : i32
    %c0_i32_1 = arith.constant 0 : i32
    return %c0_i32, %c0_i32_0 : i32, i32
  }
  func.func @transform_3(%arg0: i32, %arg1: i32) -> (i32, i32, i32) {
    %c0_i32 = arith.constant 0 : i32
    %c0_i32_0 = arith.constant 0 : i32
    return %arg0, %arg1, %c0_i32 : i32, i32, i32
  }
}

</mosaic_0001>

<llo_original>
// kernel: tpu_custom_call.1
$region0: #{tpu_custom_call.1}
  #allocation0 [shape = 'u32[]', space=smem, size = 0x4, offset = 0x4, fixed_abs, tag = 'smem constant byte address 0x4 - core index']
  #allocation1 [shape = 'u32[72,128]{1,0:T(1,128)}', space=vmem, size = 0x9000, scoped, tag = 'internal scratch']
  %s0 = inlined_call_operand.hbm [shape: f32[2,128,128], index: 0, kind: input, shape index: {}]
  %s1 = inlined_call_operand.hbm [shape: f32[128,384], index: 1, kind: input, shape index: {}]
  %s2 = inlined_call_operand.hbm [shape: f32[1,384], index: 2, kind: input, shape index: {}]
  %s3 = inlined_call_operand.hbm [shape: f32[2,128,384], index: 3, kind: output, shape index: {}]
  %s4 = sld [smem:[#allocation0]]
  $region57: #{tpu_custom_call.1} parent=0
    _
  %s6 = ssub.s32 1, %s4
  %s7 = scalar_select 0, %s6, %s4
  $region1: #{tpu_custom_call.1} parent=0
    #allocation2 [shape = 'u8[65536]{0}', space=vmem, size = 0x10000, scoped, tag = 'input window, operand 0']
    #allocation3 [shape = 's32[2]{0}', space=sflag, size = 0x8, scoped, tag = 'scoped memory for tpu_custom_call.1']
    #allocation4 [shape = 's32[2]{0}', space=sflag, size = 0x8, scoped, tag = 'scoped memory for tpu_custom_call.1']
    #allocation5 [shape = 'u8[196608]{0}', space=vmem, size = 0x30000, scoped, tag = 'input window, operand 1, single buffered']
    #allocation6 [shape = 's32[1]{0}', space=sflag, size = 0x4, scoped, tag = 'scoped memory for tpu_custom_call.1']
    #allocation7 [shape = 'u8[1536]{0}', space=vmem, size = 0x800, scoped, tag = 'input window, operand 2, single buffered']
    #allocation8 [shape = 'u8[196608]{0}', space=vmem, size = 0x30000, scoped, tag = 'output window, operand 0']
    %8 = vsyncpa [#allocation3], 0
    %s9 = scalar_lea.sflag [#allocation3], 1
    %10 = vsyncpa %s9, 0
    %11 = vsyncpa [#allocation6], 0
    %12 = vsyncpa [#allocation4], 0
    %s13 = scalar_lea.sflag [#allocation4], 1
    %14 = vsyncpa %s13, 0
    loop: start=0, step=1, limit=6
    $region2: #{tpu_custom_call.1} parent=1 // loop_pre_header
      _
    $region3: #{tpu_custom_call.1} parent=1 // loop_header
      %s16 = sphi 0, %s20
      %p17 = scmp.ge.s32.totalorder %s16, 6
      %s23 = sphi 0, %s35
      %s24 = sphi 0, %s31
      %s25 = sphi 0, %s23
      %s26 = sphi 0, %s24
      %s27 = sphi 0, %s25
      %s28 = sphi 0, %s26
      %s40 = sphi 0, %s42
      %s43 = sphi 0, %s40
      %s44 = sphi 0, %s43
      %s60 = sphi 0, %s44
      %s64 = sphi 0, %s64
      %s66 = sphi 0, %s64
      %s67 = sphi 0, %s66
      %s81 = sphi 0, %s67
      %s85 = sphi 0, %s85
      %s87 = sphi 0, %s85
      %s88 = sphi 0, %s87
      %s102 = sphi 0, %s88
      %s110 = sphi 0, %s112
      %s113 = sphi 0, %s110
      %s114 = sphi 0, %s113
      %s130 = sphi 0, %s114
    $region4: #{tpu_custom_call.1} parent=1 // loop_header_branch
      %19 = sbr.rel (%p17) target = $region8
    $region5: #{tpu_custom_call.1} parent=1 // loop_body
      %s21 = ssub.s32 %s16, 1
      %s22 = ssub.s32 %s16, 2
      %s29 = sadd.s32 1, %s24
      %p30 = scmp.ge.s32.totalorder %s29, 2
      %s31 = scalar_select %p30, 0, %s29
      %s32 = sadd.s32 1, %s23
      %s33 = scalar_select %p30, %s32, %s23
      %p34 = scmp.ge.s32.totalorder %s33, 2
      %s35 = scalar_select %p34, 0, %s33
      %s36 = ssub.s32 %s23, %s35
      %s37 = ssub.s32 %s24, %s31
      %s38 = sor.u32 %s36, %s37
      %p39 = scmp.eq.s32.totalorder %s38, 0
      %s41 = sadd.s32 %s40, 1
      %s42 = scalar_select %p39, %s40, %s41
      %p45 = pneg %p39
      %p46 = scmp.eq.s32.totalorder %s16, 3
      %p47 = por %p45, %p46
      %p48 = scmp.ne.s32.totalorder %s40, %s43
      %p49 = scmp.eq.s32.totalorder %s16, 0
      %p50 = por %p48, %p49
      %p51 = scmp.ne.s32.totalorder %s40, %s43
      %p52 = scmp.eq.s32.totalorder %s21, 3
      %p53 = por %p51, %p52
      %p54 = scmp.ne.s32.totalorder %s43, %s44
      %p55 = scmp.eq.s32.totalorder %s21, 0
      %p56 = por %p54, %p55
      %p57 = scmp.ne.s32.totalorder %s43, %s44
      %p58 = scmp.eq.s32.totalorder %s22, 3
      %p59 = por %p57, %p58
      %p61 = scmp.ne.s32.totalorder %s44, %s60
      %p62 = scmp.eq.s32.totalorder %s22, 0
      %p63 = por %p61, %p62
      %s65 = sadd.s32 %s64, 1
      %p68 = scmp.eq.s32.totalorder %s16, 3
      %p69 = scmp.ne.s32.totalorder %s64, %s66
      %p70 = scmp.eq.s32.totalorder %s16, 0
      %p71 = por %p69, %p70
      %p72 = scmp.ne.s32.totalorder %s64, %s66
      %p73 = scmp.eq.s32.totalorder %s21, 3
      %p74 = por %p72, %p73
      %p75 = scmp.ne.s32.totalorder %s66, %s67
      %p76 = scmp.eq.s32.totalorder %s21, 0
      %p77 = por %p75, %p76
      %p78 = scmp.ne.s32.totalorder %s66, %s67
      %p79 = scmp.eq.s32.totalorder %s22, 3
      %p80 = por %p78, %p79
      %p82 = scmp.ne.s32.totalorder %s67, %s81
      %p83 = scmp.eq.s32.totalorder %s22, 0
      %p84 = por %p82, %p83
      %s86 = sadd.s32 %s85, 1
      %p89 = scmp.eq.s32.totalorder %s16, 3
      %p90 = scmp.ne.s32.totalorder %s85, %s87
      %p91 = scmp.eq.s32.totalorder %s16, 0
      %p92 = por %p90, %p91
      %p93 = scmp.ne.s32.totalorder %s85, %s87
      %p94 = scmp.eq.s32.totalorder %s21, 3
      %p95 = por %p93, %p94
      %p96 = scmp.ne.s32.totalorder %s87, %s88
      %p97 = scmp.eq.s32.totalorder %s21, 0
      %p98 = por %p96, %p97
      %p99 = scmp.ne.s32.totalorder %s87, %s88
      %p100 = scmp.eq.s32.totalorder %s22, 3
      %p101 = por %p99, %p100
      %p103 = scmp.ne.s32.totalorder %s88, %s102
      %p104 = scmp.eq.s32.totalorder %s22, 0
      %p105 = por %p103, %p104
      %s106 = ssub.s32 %s23, %s35
      %s107 = ssub.s32 %s24, %s31
      %s108 = sor.u32 %s106, %s107
      %p109 = scmp.eq.s32.totalorder %s108, 0
      %s111 = sadd.s32 %s110, 1
      %s112 = scalar_select %p109, %s110, %s111
      %p115 = pneg %p109
      %p116 = scmp.eq.s32.totalorder %s16, 3
      %p117 = por %p115, %p116
      %p118 = scmp.ne.s32.totalorder %s110, %s113
      %p119 = scmp.eq.s32.totalorder %s16, 0
      %p120 = por %p118, %p119
      %p121 = scmp.ne.s32.totalorder %s110, %s113
      %p122 = scmp.eq.s32.totalorder %s21, 3
      %p123 = por %p121, %p122
      %p124 = scmp.ne.s32.totalorder %s113, %s114
      %p125 = scmp.eq.s32.totalorder %s21, 0
      %p126 = por %p124, %p125
      %p127 = scmp.ne.s32.totalorder %s113, %s114
      %p128 = scmp.eq.s32.totalorder %s22, 3
      %p129 = por %p127, %p128
      %p131 = scmp.ne.s32.totalorder %s114, %s130
      %p132 = scmp.eq.s32.totalorder %s22, 0
      %p133 = por %p131, %p132
      %p134 = scmp.le.s32.totalorder 1, %s16
      %p135 = scmp.lt.s32.totalorder %s16, 5
      %p136 = pnand %p134, %p135
      %p137 = pneg %p136
      // Predicated region
      $region9: #{tpu_custom_call.1} parent=5 // pred_check
        _
      $region10: #{tpu_custom_call.1} parent=5 // pred_check_branch
        %139 = sbr.rel (%p136) target = $region12
      $region11: #{tpu_custom_call.1} parent=5 // pred_region
        %s140 = ssub.s32 %s16, 1
        // Predicated region
        $region13: #{tpu_custom_call.1} parent=11 // pred_check
          %p141 = pneg %p77
        $region14: #{tpu_custom_call.1} parent=11 // pred_check_branch
          %143 = sbr.rel (%p141) target = $region16
        $region15: #{tpu_custom_call.1} parent=11 // pred_region
          %145 = vsyncadd [#allocation6], 0
          %s146 = sshll.u32 %s1, 4
          %s147 = int_to_ptr.hbm [resolvable:$true] %s146
          %s148 = sshll.u32 [#allocation5], 4
          %s149 = int_to_ptr.vmem [resolvable:$true] %s148
          %154 = dma.hbm_to_vmem [thread:$0]  %s147, 6144, %s149, [#allocation6], 384, 384, 24
        $region16: #{tpu_custom_call.1} parent=11 // pred_fallthru
          _
        // Predicated region
        $region17: #{tpu_custom_call.1} parent=11 // pred_check
          %p155 = pneg %p98
        $region18: #{tpu_custom_call.1} parent=11 // pred_check_branch
          %157 = sbr.rel (%p155) target = $region20
        $region19: #{tpu_custom_call.1} parent=11 // pred_region
          %159 = vsyncadd [#allocation6], 0
          %s161 = sshll.u32 %s2, 4
          %s162 = int_to_ptr.hbm [resolvable:$true] %s161
          %s163 = sshll.u32 [#allocation7], 4
          %s164 = int_to_ptr.vmem [resolvable:$true] %s163
          %166 = dma.hbm_to_vmem [thread:$0]  %s162, 48, %s164, [#allocation6]
        $region20: #{tpu_custom_call.1} parent=11 // pred_fallthru
          _
      $region12: #{tpu_custom_call.1} parent=5 // pred_fallthru
        _
      %p167 = scmp.lt.s32.totalorder %s16, 4
      // Predicated region
      $region21: #{tpu_custom_call.1} parent=5 // pred_check
        %p168 = pneg %p167
      $region22: #{tpu_custom_call.1} parent=5 // pred_check_branch
        %170 = sbr.rel (%p168) target = $region24
      $region23: #{tpu_custom_call.1} parent=5 // pred_region
        // Predicated region
        $region25: #{tpu_custom_call.1} parent=23 // pred_check
          %p171 = pneg %p50
        $region26: #{tpu_custom_call.1} parent=23 // pred_check_branch
          %173 = sbr.rel (%p171) target = $region28
        $region27: #{tpu_custom_call.1} parent=23 // pred_region
          %s174 = sand.u32 %s40, 1
          %s175 = scalar_lea.sflag [#allocation3], %s174
          %s176 = sand.u32 %s40, 1
          %s177 = smul.addr %s176, 64
          %s178 = scalar_lea.vmem [#allocation2], %s177
          %s179 = smul.u32 8, %s24
          %181 = vsyncadd %s175, 0
          %s182 = smul.addr %s23, 16
          %s183 = sadd.s32 %s179, %s182
          %s184 = smul.addr %s183, 8
          %s185 = scalar_lea.hbm %s0, %s184
          %s186 = sshll.u32 %s185, 4
          %s187 = int_to_ptr.hbm [resolvable:$true] %s186
          %s188 = sshll.u32 %s178, 4
          %s189 = int_to_ptr.vmem [resolvable:$true] %s188
          %194 = dma.hbm_to_vmem [thread:$0]  %s187, 1024, %s189, %s175, 128, 128, 8
        $region28: #{tpu_custom_call.1} parent=23 // pred_fallthru
          _
      $region24: #{tpu_custom_call.1} parent=5 // pred_fallthru
        _
      %p195 = scmp.le.s32.totalorder 1, %s16
      %p196 = scmp.lt.s32.totalorder %s16, 5
      %p197 = pnand %p195, %p196
      %p198 = pneg %p197
      // Predicated region
      $region29: #{tpu_custom_call.1} parent=5 // pred_check
        _
      $region30: #{tpu_custom_call.1} parent=5 // pred_check_branch
        %200 = sbr.rel (%p197) target = $region32
      $region31: #{tpu_custom_call.1} parent=5 // pred_region
        %s201 = ssub.s32 %s16, 1
        %s202 = sand.u32 %s43, 1
        %s203 = scalar_lea.sflag [#allocation3], %s202
        %s204 = sand.u32 %s43, 1
        %s205 = smul.addr %s204, 64
        %s206 = scalar_lea.vmem [#allocation2], %s205
        // Predicated region
        $region33: #{tpu_custom_call.1} parent=31 // pred_check
          %p207 = pneg %p56
        $region34: #{tpu_custom_call.1} parent=31 // pred_check_branch
          %209 = sbr.rel (%p207) target = $region36
        $region35: #{tpu_custom_call.1} parent=31 // pred_region
          %211 = dma.done %s203, 1024
        $region36: #{tpu_custom_call.1} parent=31 // pred_fallthru
          _
        // Predicated region
        $region37: #{tpu_custom_call.1} parent=31 // pred_check
          %p212 = pneg %p77
        $region38: #{tpu_custom_call.1} parent=31 // pred_check_branch
          %214 = sbr.rel (%p212) target = $region40
        $region39: #{tpu_custom_call.1} parent=31 // pred_region
          %216 = dma.done [#allocation6], 6144
        $region40: #{tpu_custom_call.1} parent=31 // pred_fallthru
          _
        // Predicated region
        $region41: #{tpu_custom_call.1} parent=31 // pred_check
          %p217 = pneg %p98
        $region42: #{tpu_custom_call.1} parent=31 // pred_check_branch
          %219 = sbr.rel (%p217) target = $region44
        $region43: #{tpu_custom_call.1} parent=31 // pred_region
          %221 = dma.done [#allocation6], 48
        $region44: #{tpu_custom_call.1} parent=31 // pred_fallthru
          _
        %s222 = sand.u32 %s43, 1
        %s223 = scalar_lea.sflag [#allocation3], %s222
        %s224 = sand.u32 %s43, 1
        %s225 = smul.addr %s224, 64
        %s226 = scalar_lea.vmem [#allocation2], %s225
        %p227 = pneg %p56
        %p228 = pneg %p53
        %p229 = pneg %p77
        %p230 = pneg %p74
        %p231 = pneg %p98
        %p232 = pneg %p95
        %p233 = pneg %p126
        %p234 = pneg %p123
        %s235 = sand.u32 %s113, 1
        %s236 = scalar_lea.sflag [#allocation4], %s235
        %s237 = sand.u32 %s113, 1
        %s238 = smul.addr %s237, 192
        %s239 = scalar_lea.vmem [#allocation8], %s238
        %s240 = smul.u32 8, %s26
        %s241 = smul.u32 8, %s26
        %v242 = vld [vmem:[%s206] sm:$0xff]
        %v243 = vld [vmem:[%s206 + $0x8] sm:$0xff]
        %v244 = vld [vmem:[%s206 + $0x10] sm:$0xff]
        %v245 = vld [vmem:[%s206 + $0x18] sm:$0xff]
        %v246 = vld [vmem:[%s206 + $0x20] sm:$0xff]
        %v247 = vld [vmem:[%s206 + $0x28] sm:$0xff]
        %v248 = vld [vmem:[%s206 + $0x30] sm:$0xff]
        %v249 = vld [vmem:[%s206 + $0x38] sm:$0xff]
        %v250 = vld [vmem:[#allocation5] sm:$0xff]
        %v251 = vld [vmem:[#allocation5 + $0x8] sm:$0xff]
        %v252 = vld [vmem:[#allocation5 + $0x10] sm:$0xff]
        %v253 = vld [vmem:[#allocation5 + $0x18] sm:$0xff]
        %v254 = vld [vmem:[#allocation5 + $0x20] sm:$0xff]
        %v255 = vld [vmem:[#allocation5 + $0x28] sm:$0xff]
        %v256 = vld [vmem:[#allocation5 + $0x30] sm:$0xff]
        %v257 = vld [vmem:[#allocation5 + $0x38] sm:$0xff]
        %v258 = vld [vmem:[#allocation5 + $0x40] sm:$0xff]
        %v259 = vld [vmem:[#allocation5 + $0x48] sm:$0xff]
        %v260 = vld [vmem:[#allocation5 + $0x50] sm:$0xff]
        %v261 = vld [vmem:[#allocation5 + $0x58] sm:$0xff]
        %v262 = vld [vmem:[#allocation5 + $0x60] sm:$0xff]
        %v263 = vld [vmem:[#allocation5 + $0x68] sm:$0xff]
        %v264 = vld [vmem:[#allocation5 + $0x70] sm:$0xff]
        %v265 = vld [vmem:[#allocation5 + $0x78] sm:$0xff]
        %v266 = vld [vmem:[#allocation5 + $0x80] sm:$0xff]
        %v267 = vld [vmem:[#allocation5 + $0x88] sm:$0xff]
        %v268 = vld [vmem:[#allocation5 + $0x90] sm:$0xff]
        %v269 = vld [vmem:[#allocation5 + $0x98] sm:$0xff]
        %v270 = vld [vmem:[#allocation5 + $0xa0] sm:$0xff]
        %v271 = vld [vmem:[#allocation5 + $0xa8] sm:$0xff]
        %v272 = vld [vmem:[#allocation5 + $0xb0] sm:$0xff]
        %v273 = vld [vmem:[#allocation5 + $0xb8] sm:$0xff]
        %v274 = vld [vmem:[#allocation5 + $0xc0] sm:$0xff]
        %v275 = vld [vmem:[#allocation5 + $0xc8] sm:$0xff]
        %v276 = vld [vmem:[#allocation5 + $0xd0] sm:$0xff]
        %v277 = vld [vmem:[#allocation5 + $0xd8] sm:$0xff]
        %v278 = vld [vmem:[#allocation5 + $0xe0] sm:$0xff]
        %v279 = vld [vmem:[#allocation5 + $0xe8] sm:$0xff]
        %v280 = vld [vmem:[#allocation5 + $0xf0] sm:$0xff]
        %v281 = vld [vmem:[#allocation5 + $0xf8] sm:$0xff]
        %v282 = vld [vmem:[#allocation5 + $0x100] sm:$0xff]
        %v283 = vld [vmem:[#allocation5 + $0x108] sm:$0xff]
        %v284 = vld [vmem:[#allocation5 + $0x110] sm:$0xff]
        %v285 = vld [vmem:[#allocation5 + $0x118] sm:$0xff]
        %v286 = vld [vmem:[#allocation5 + $0x120] sm:$0xff]
        %v287 = vld [vmem:[#allocation5 + $0x128] sm:$0xff]
        %v288 = vld [vmem:[#allocation5 + $0x130] sm:$0xff]
        %v289 = vld [vmem:[#allocation5 + $0x138] sm:$0xff]
        %v290 = vld [vmem:[#allocation5 + $0x140] sm:$0xff]
        %v291 = vld [vmem:[#allocation5 + $0x148] sm:$0xff]
        %v292 = vld [vmem:[#allocation5 + $0x150] sm:$0xff]
        %v293 = vld [vmem:[#allocation5 + $0x158] sm:$0xff]
        %v294 = vld [vmem:[#allocation5 + $0x160] sm:$0xff]
        %v295 = vld [vmem:[#allocation5 + $0x168] sm:$0xff]
        %v296 = vld [vmem:[#allocation5 + $0x170] sm:$0xff]
        %v297 = vld [vmem:[#allocation5 + $0x178] sm:$0xff]
        %v298 = vld [vmem:[#allocation7] sm:$0x7]
        %v300 = vperm.slane %v298, 0
        %v301 = vperm.slane %v298, 1
        %v302 = vperm.slane %v298, 2
        %306 = vmatpush.msra.mxu0 %v295
        %307 = vmatpush.msra.mxu0 %v292
        %308 = vmatpush.msra.mxu0 %v289
        %309 = vmatpush.msra.mxu0 %v286
        %310 = vmatpush.msra.mxu0 %v283
        %311 = vmatpush.msra.mxu0 %v280
        %312 = vmatpush.msra.mxu0 %v277
        %313 = vmatpush.msra.mxu0 %v274
        %314 = vmatpush.msra.mxu0 %v271
        %315 = vmatpush.msra.mxu0 %v268
        %316 = vmatpush.msra.mxu0 %v265
        %317 = vmatpush.msra.mxu0 %v262
        %318 = vmatpush.msra.mxu0 %v259
        %319 = vmatpush.msra.mxu0 %v256
        %320 = vmatpush.msra.mxu0 %v253
        %321 = vmatpush.msra.mxu0 %v250
        %322 = vmatmul.f32.gmra.mxu0 %v242
        %v323 = vpop.f32.mrf.mxu0
        %v324 = vadd.f32 %v300, %v323
        %325 = vmatmul.f32.gmra.mxu0 %v243
        %v326 = vpop.f32.mrf.mxu0
        %v327 = vadd.f32 %v300, %v326
        %328 = vmatmul.f32.gmra.mxu0 %v244
        %v329 = vpop.f32.mrf.mxu0
        %v330 = vadd.f32 %v300, %v329
        %331 = vmatmul.f32.gmra.mxu0 %v245
        %v332 = vpop.f32.mrf.mxu0
        %v333 = vadd.f32 %v300, %v332
        %334 = vmatmul.f32.gmra.mxu0 %v246
        %v335 = vpop.f32.mrf.mxu0
        %v336 = vadd.f32 %v300, %v335
        %337 = vmatmul.f32.gmra.mxu0 %v247
        %v338 = vpop.f32.mrf.mxu0
        %v339 = vadd.f32 %v300, %v338
        %340 = vmatmul.f32.gmra.mxu0 %v248
        %v341 = vpop.f32.mrf.mxu0
        %v342 = vadd.f32 %v300, %v341
        %343 = vmatmul.f32.gmra.mxu0 %v249
        %v344 = vpop.f32.mrf.mxu0
        %v345 = vadd.f32 %v300, %v344
        %346 = vdwg.mxu0
        %347 = vmatpush.msra.mxu0 %v296
        %348 = vmatpush.msra.mxu0 %v293
        %349 = vmatpush.msra.mxu0 %v290
        %350 = vmatpush.msra.mxu0 %v287
        %351 = vmatpush.msra.mxu0 %v284
        %352 = vmatpush.msra.mxu0 %v281
        %353 = vmatpush.msra.mxu0 %v278
        %354 = vmatpush.msra.mxu0 %v275
        %355 = vmatpush.msra.mxu0 %v272
        %356 = vmatpush.msra.mxu0 %v269
        %357 = vmatpush.msra.mxu0 %v266
        %358 = vmatpush.msra.mxu0 %v263
        %359 = vmatpush.msra.mxu0 %v260
        %360 = vmatpush.msra.mxu0 %v257
        %361 = vmatpush.msra.mxu0 %v254
        %362 = vmatpush.msra.mxu0 %v251
        %363 = vmatmul.f32.gmra.mxu0 %v242
        %v364 = vpop.f32.mrf.mxu0
        %v365 = vadd.f32 %v301, %v364
        %366 = vmatmul.f32.gmra.mxu0 %v243
        %v367 = vpop.f32.mrf.mxu0
        %v368 = vadd.f32 %v301, %v367
        %369 = vmatmul.f32.gmra.mxu0 %v244
        %v370 = vpop.f32.mrf.mxu0
        %v371 = vadd.f32 %v301, %v370
        %372 = vmatmul.f32.gmra.mxu0 %v245
        %v373 = vpop.f32.mrf.mxu0
        %v374 = vadd.f32 %v301, %v373
        %375 = vmatmul.f32.gmra.mxu0 %v246
        %v376 = vpop.f32.mrf.mxu0
        %v377 = vadd.f32 %v301, %v376
        %378 = vmatmul.f32.gmra.mxu0 %v247
        %v379 = vpop.f32.mrf.mxu0
        %v380 = vadd.f32 %v301, %v379
        %381 = vmatmul.f32.gmra.mxu0 %v248
        %v382 = vpop.f32.mrf.mxu0
        %v383 = vadd.f32 %v301, %v382
        %384 = vmatmul.f32.gmra.mxu0 %v249
        %v385 = vpop.f32.mrf.mxu0
        %v386 = vadd.f32 %v301, %v385
        %387 = vdwg.mxu0
        %388 = vmatpush.msra.mxu0 %v297
        %389 = vmatpush.msra.mxu0 %v294
        %390 = vmatpush.msra.mxu0 %v291
        %391 = vmatpush.msra.mxu0 %v288
        %392 = vmatpush.msra.mxu0 %v285
        %393 = vmatpush.msra.mxu0 %v282
        %394 = vmatpush.msra.mxu0 %v279
        %395 = vmatpush.msra.mxu0 %v276
        %396 = vmatpush.msra.mxu0 %v273
        %397 = vmatpush.msra.mxu0 %v270
        %398 = vmatpush.msra.mxu0 %v267
        %399 = vmatpush.msra.mxu0 %v264
        %400 = vmatpush.msra.mxu0 %v261
        %401 = vmatpush.msra.mxu0 %v258
        %402 = vmatpush.msra.mxu0 %v255
        %403 = vmatpush.msra.mxu0 %v252
        %404 = vmatmul.f32.gmra.mxu0 %v242
        %v405 = vpop.f32.mrf.mxu0
        %v406 = vadd.f32 %v302, %v405
        %407 = vmatmul.f32.gmra.mxu0 %v243
        %v408 = vpop.f32.mrf.mxu0
        %v409 = vadd.f32 %v302, %v408
        %410 = vmatmul.f32.gmra.mxu0 %v244
        %v411 = vpop.f32.mrf.mxu0
        %v412 = vadd.f32 %v302, %v411
        %413 = vmatmul.f32.gmra.mxu0 %v245
        %v414 = vpop.f32.mrf.mxu0
        %v415 = vadd.f32 %v302, %v414
        %416 = vmatmul.f32.gmra.mxu0 %v246
        %v417 = vpop.f32.mrf.mxu0
        %v418 = vadd.f32 %v302, %v417
        %419 = vmatmul.f32.gmra.mxu0 %v247
        %v420 = vpop.f32.mrf.mxu0
        %v421 = vadd.f32 %v302, %v420
        %422 = vmatmul.f32.gmra.mxu0 %v248
        %v423 = vpop.f32.mrf.mxu0
        %v424 = vadd.f32 %v302, %v423
        %425 = vmatmul.f32.gmra.mxu0 %v249
        %v426 = vpop.f32.mrf.mxu0
        %v427 = vadd.f32 %v302, %v426
        %428 = vdwg.mxu0
        %429 = vst [vmem:[%s239] sm:$0xff] %v324
        %430 = vst [vmem:[%s239 + $0x8] sm:$0xff] %v365
        %431 = vst [vmem:[%s239 + $0x10] sm:$0xff] %v406
        %432 = vst [vmem:[%s239 + $0x18] sm:$0xff] %v327
        %433 = vst [vmem:[%s239 + $0x20] sm:$0xff] %v368
        %434 = vst [vmem:[%s239 + $0x28] sm:$0xff] %v409
        %435 = vst [vmem:[%s239 + $0x30] sm:$0xff] %v330
        %436 = vst [vmem:[%s239 + $0x38] sm:$0xff] %v371
        %437 = vst [vmem:[%s239 + $0x40] sm:$0xff] %v412
        %438 = vst [vmem:[%s239 + $0x48] sm:$0xff] %v333
        %439 = vst [vmem:[%s239 + $0x50] sm:$0xff] %v374
        %440 = vst [vmem:[%s239 + $0x58] sm:$0xff] %v415
        %441 = vst [vmem:[%s239 + $0x60] sm:$0xff] %v336
        %442 = vst [vmem:[%s239 + $0x68] sm:$0xff] %v377
        %443 = vst [vmem:[%s239 + $0x70] sm:$0xff] %v418
        %444 = vst [vmem:[%s239 + $0x78] sm:$0xff] %v339
        %445 = vst [vmem:[%s239 + $0x80] sm:$0xff] %v380
        %446 = vst [vmem:[%s239 + $0x88] sm:$0xff] %v421
        %447 = vst [vmem:[%s239 + $0x90] sm:$0xff] %v342
        %448 = vst [vmem:[%s239 + $0x98] sm:$0xff] %v383
        %449 = vst [vmem:[%s239 + $0xa0] sm:$0xff] %v424
        %450 = vst [vmem:[%s239 + $0xa8] sm:$0xff] %v345
        %451 = vst [vmem:[%s239 + $0xb0] sm:$0xff] %v386
        %452 = vst [vmem:[%s239 + $0xb8] sm:$0xff] %v427
        %s453 = sand.u32 %s113, 1
        %s454 = scalar_lea.sflag [#allocation4], %s453
        %s455 = sand.u32 %s113, 1
        %s456 = smul.addr %s455, 192
        %s457 = scalar_lea.vmem [#allocation8], %s456
        // Predicated region
        $region45: #{tpu_custom_call.1} parent=31 // pred_check
          %p458 = pneg %p123
        $region46: #{tpu_custom_call.1} parent=31 // pred_check_branch
          %460 = sbr.rel (%p458) target = $region48
        $region47: #{tpu_custom_call.1} parent=31 // pred_region
          %s461 = smul.u32 8, %s26
          %463 = vsyncadd %s454, 0
          %s464 = smul.addr %s461, 3
          %s465 = smul.addr %s25, 48
          %s466 = sadd.s32 %s464, %s465
          %s467 = smul.addr %s466, 8
          %s468 = scalar_lea.hbm %s3, %s467
          %s469 = sshll.u32 %s457, 4
          %s470 = int_to_ptr.vmem [resolvable:$true] %s469
          %s471 = sshll.u32 %s468, 4
          %s472 = int_to_ptr.hbm [resolvable:$true] %s471
          %477 = dma.vmem_to_hbm [thread:$0]  %s470, 3072, %s472, %s454, 384, 384, 24
        $region48: #{tpu_custom_call.1} parent=31 // pred_fallthru
          _
      $region32: #{tpu_custom_call.1} parent=5 // pred_fallthru
        _
      %p478 = scmp.le.s32.totalorder 2, %s16
      // Predicated region
      $region49: #{tpu_custom_call.1} parent=5 // pred_check
        %p479 = pneg %p478
      $region50: #{tpu_custom_call.1} parent=5 // pred_check_branch
        %481 = sbr.rel (%p479) target = $region52
      $region51: #{tpu_custom_call.1} parent=5 // pred_region
        %s482 = ssub.s32 %s16, 2
        // Predicated region
        $region53: #{tpu_custom_call.1} parent=51 // pred_check
          %p483 = pneg %p129
        $region54: #{tpu_custom_call.1} parent=51 // pred_check_branch
          %485 = sbr.rel (%p483) target = $region56
        $region55: #{tpu_custom_call.1} parent=51 // pred_region
          %s486 = sand.u32 %s114, 1
          %s487 = scalar_lea.sflag [#allocation4], %s486
          %s488 = sand.u32 %s114, 1
          %s489 = smul.addr %s488, 192
          %s490 = scalar_lea.vmem [#allocation8], %s489
          %492 = dma.done %s487, 3072
        $region56: #{tpu_custom_call.1} parent=51 // pred_fallthru
          _
      $region52: #{tpu_custom_call.1} parent=5 // pred_fallthru
        _
    $region6: #{tpu_custom_call.1} parent=1 // loop_footer
      %s20 = sadd.s32 1, %s16
    $region7: #{tpu_custom_call.1} parent=1 // loop_footer_branch
      %15 = sbr.rel target = $region3
    $region8: #{tpu_custom_call.1} parent=1 // loop_exit
      _
    %493 = vsyncpa [#allocation3], 1
    %s494 = scalar_lea.sflag [#allocation3], 1
    %495 = vsyncpa %s494, 1
    %496 = vsyncpa [#allocation6], 1
    %497 = vsyncpa [#allocation4], 1
    %s498 = scalar_lea.sflag [#allocation4], 1
    %499 = vsyncpa %s498, 1

</llo_original>
